<compile_context>
chip_gen: v5e
topology: v5e:2x2
jax: 0.10.0
libtpu: 0.0.40
codegen_flags: <defaults>
</compile_context>

<pallas_src>
import functools

import jax
import jax.numpy as jnp
from jax.experimental import pallas as pl
from jax.experimental.pallas import tpu as pltpu


def _round_up(x, m):
    return ((x + m - 1) // m) * m


def _mynet_head_kernel(feat_ref, w_ref, o_ref, y_acc_ref, *,
                       p, gem_eps, bn_eps, l2_eps, b_actual, tile_b):
    i = pl.program_id(0)

    # --- GeM pooling: mean over the spatial axis (sublanes); C is on lanes.
    x = feat_ref[...]                          # (tile_b, HW, C_pad) f32
    xc = jnp.maximum(x, gem_eps)

    p_int = int(round(p)) if float(p).is_integer() and 1.0 <= p <= 8.0 else None
    if p_int is not None:
        xp = xc
        for _ in range(p_int - 1):             # p=3 -> 2 VPU multiplies, no EUP
            xp = xp * xc
    else:
        xp = jnp.exp(p * jnp.log(xc))          # general non-integer p

    m = jnp.mean(xp, axis=1)                   # (tile_b, C_pad) sublane reduce
    pooled = jnp.exp(jnp.log(m) / p)           # m^(1/p); m >= eps^p > 0, tiny array

    # --- fc (no bias): (tile_b, C_pad) @ (C_pad, D_pad) on the MXU
    y = jnp.dot(pooled, w_ref[...], preferred_element_type=jnp.float32)
    start = pl.multiple_of(i * tile_b, tile_b)
    y_acc_ref[pl.ds(start, tile_b), :] = y     # resident y accumulator

    # --- finalize on the last batch tile: BatchNorm1d (batch stats) + L2 norm
    @pl.when(i == pl.num_programs(0) - 1)
    def _():
        yall = y_acc_ref[...]                  # (B_pad, D_pad)
        b_pad = yall.shape[0]
        inv_b = 1.0 / float(b_actual)

        if b_pad != b_actual:                  # mask padded batch rows out of stats
            row = jax.lax.broadcasted_iota(jnp.int32, yall.shape, 0)
            valid = row < b_actual
            yv = jnp.where(valid, yall, 0.0)
        else:
            valid = None
            yv = yall

        mu = jnp.sum(yv, axis=0, keepdims=True) * inv_b
        centered = yall - mu
        cv = jnp.where(valid, centered, 0.0) if valid is not None else centered
        var = jnp.sum(cv * cv, axis=0, keepdims=True) * inv_b   # biased variance
        ybn = centered * jax.lax.rsqrt(var + bn_eps)            # gamma=1, beta=0

        # F.normalize(dim=1, eps=1e-12): x / max(||x||, eps) == x * rsqrt(max(ssq, eps^2))
        ssq = jnp.sum(ybn * ybn, axis=-1, keepdims=True)
        o_ref[...] = ybn * jax.lax.rsqrt(jnp.maximum(ssq, l2_eps * l2_eps))


def mynet_head(feat_nchw, fc_weight, *, p=3.0, gem_eps=1e-6, bn_eps=1e-5,
               l2_eps=1e-12, tile_b=None):
    """feat_nchw: (B, C, H, W) backbone output.  fc_weight: (out_dim, C) PyTorch layout."""
    B, C, H, W = feat_nchw.shape
    out_dim = fc_weight.shape[0]
    HW = H * W

    # Lane-dense padding for matmul operands and the output store.
    C_pad = _round_up(C, 128)
    D_pad = _round_up(out_dim, 128)

    # NHWC-flatten once in glue: (B, HW, C) with C on the lane axis.
    feat = jnp.transpose(feat_nchw, (0, 2, 3, 1)).reshape(B, HW, C)
    feat = feat.astype(jnp.float32)
    if C_pad != C:
        feat = jnp.pad(feat, ((0, 0), (0, 0), (0, C_pad - C)))

    # fc weight -> (C_pad, D_pad); zero-padded rows/cols contribute nothing.
    w_t = jnp.transpose(fc_weight).astype(jnp.float32)
    w_t = jnp.pad(w_t, ((0, C_pad - C), (0, D_pad - out_dim)))

    # Batch tile: keep each double-buffered feat block <= ~4 MiB (safe on
    # v5e's 16 MiB default scoped VMEM, plenty of headroom on v6e/v7x).
    if tile_b is None:
        row_bytes = HW * C_pad * 4
        tile_b = max(1, min(B, (4 << 20) // max(row_bytes, 1)))
    B_pad = _round_up(B, tile_b)
    if B_pad != B:
        feat = jnp.pad(feat, ((0, B_pad - B), (0, 0), (0, 0)))
    num_tiles = B_pad // tile_b

    kernel = functools.partial(
        _mynet_head_kernel, p=p, gem_eps=gem_eps, bn_eps=bn_eps,
        l2_eps=l2_eps, b_actual=B, tile_b=tile_b)

    out = pl.pallas_call(
        kernel,
        out_shape=jax.ShapeDtypeStruct((B_pad, D_pad), jnp.float32),
        grid_spec=pltpu.PrefetchScalarGridSpec(
            num_scalar_prefetch=0,
            grid=(num_tiles,),
            in_specs=[
                pl.BlockSpec((tile_b, HW, C_pad), lambda i: (i, 0, 0)),
                pl.BlockSpec((C_pad, D_pad), lambda i: (0, 0)),
            ],
            out_specs=pl.BlockSpec((B_pad, D_pad), lambda i: (0, 0)),
            scratch_shapes=[pltpu.VMEM((B_pad, D_pad), jnp.float32)],
        ),
        compiler_params=pltpu.CompilerParams(
            # BN statistics span all batch tiles -> serial accumulation axis.
            dimension_semantics=("arbitrary",)),
    )(feat, w_t)

    return out[:B, :out_dim]


def _reference(feat_nchw, fc_weight, p=3.0, gem_eps=1e-6, bn_eps=1e-5, l2_eps=1e-12):
    x = jnp.maximum(feat_nchw, gem_eps) ** p
    pooled = jnp.mean(x, axis=(2, 3)) ** (1.0 / p)                  # (B, C)
    y = pooled @ fc_weight.T                                        # (B, D)
    mu = jnp.mean(y, axis=0, keepdims=True)
    var = jnp.mean((y - mu) ** 2, axis=0, keepdims=True)
    ybn = (y - mu) / jnp.sqrt(var + bn_eps)
    nrm = jnp.maximum(jnp.linalg.norm(ybn, axis=1, keepdims=True), l2_eps)
    return ybn / nrm


if __name__ == "__main__":
    key = jax.random.PRNGKey(0)
    B, C, H, W = 16, 128, 8, 8
    out_dim = 256

    k_x, k_w = jax.random.split(key)
    # Backbone's last feature map (stand-in for backbone(x)[-1]).
    x = jax.random.normal(k_x, (B, C, H, W), dtype=jnp.float32)
    # fc weight, xavier_normal_: std = sqrt(2 / (fan_in + fan_out)), shape (out_dim, C).
    xavier_std = (2.0 / (C + out_dim)) ** 0.5
    fc_w = xavier_std * jax.random.normal(k_w, (out_dim, C), dtype=jnp.float32)

    # tile_b=8 -> 2 grid steps, exercising the streamed GeM+matmul + BN finalize path.
    out = mynet_head(x, fc_w, p=3.0, tile_b=8)
    out = jax.block_until_ready(out)

    ref = _reference(x, fc_w, p=3.0)
    assert out.shape == (B, out_dim)
    assert jnp.allclose(out, ref, atol=1e-4, rtol=1e-4), "mismatch vs reference"

    print("KERNEL_OK")
</pallas_src>

<mosaic_0001>
module attributes {stable_mosaic.version = 11 : i64} {
  func.func @_mynet_head_kernel(%arg0: i32, %arg1: memref<8x64x128xf32, #tpu.memory_space<vmem>>, %arg2: memref<128x256xf32, #tpu.memory_space<vmem>>, %arg3: memref<16x256xf32, #tpu.memory_space<vmem>>, %arg4: memref<16x256xf32, #tpu.memory_space<vmem>>) attributes {dimension_semantics = [#tpu.dimension_semantics<arbitrary>], iteration_bounds = array<i64: 2>, scalar_prefetch = 0 : i64, scratch_operands = 1 : i64, tpu.core_type = #tpu.core_type<tc>, window_params = [{transform_indices = @transform_0, window_bounds = array<i64: 8, 64, 128>}, {pipeline_mode = #tpu.pipeline_mode<synchronous>, transform_indices = @transform_1, window_bounds = array<i64: 128, 256>}, {pipeline_mode = #tpu.pipeline_mode<synchronous>, transform_indices = @transform_2, window_bounds = array<i64: 16, 256>}]} {
    %c0 = arith.constant 0 : index
    %c0_0 = arith.constant 0 : index
    %c0_1 = arith.constant 0 : index
    %0 = vector.load %arg1[%c0, %c0_0, %c0_1] : memref<8x64x128xf32, #tpu.memory_space<vmem>>, vector<8x64x128xf32>
    %cst = arith.constant 9.99999997E-7 : f32
    %1 = vector.broadcast %cst : f32 to vector<8x64x128xf32>
    %2 = arith.maximumf %0, %1 : vector<8x64x128xf32>
    %3 = arith.mulf %2, %2 : vector<8x64x128xf32>
    %4 = arith.mulf %3, %2 : vector<8x64x128xf32>
    %cst_2 = arith.constant dense<0.000000e+00> : vector<8x128xf32>
    %5 = vector.multi_reduction <add>, %4, %cst_2 [1] : vector<8x64x128xf32> to vector<8x128xf32>
    %cst_3 = arith.constant 6.400000e+01 : f32
    %6 = vector.broadcast %cst_3 : f32 to vector<8x128xf32>
    %7 = arith.divf %5, %6 : vector<8x128xf32>
    %8 = math.log %7 : vector<8x128xf32>
    %cst_4 = arith.constant 3.000000e+00 : f32
    %9 = vector.broadcast %cst_4 : f32 to vector<8x128xf32>
    %10 = arith.divf %8, %9 : vector<8x128xf32>
    %11 = math.exp %10 : vector<8x128xf32>
    %c0_5 = arith.constant 0 : index
    %c0_6 = arith.constant 0 : index
    %12 = vector.load %arg2[%c0_5, %c0_6] : memref<128x256xf32, #tpu.memory_space<vmem>>, vector<128x256xf32>
    %cst_7 = arith.constant dense<0.000000e+00> : vector<8x256xf32>
    %13 = tpu.matmul %11, %12, %cst_7 {dimension_numbers = #tpu.dot_dimension_numbers<[1], [0], [0], [1], [0, 0, 1, 1], [], []>} : vector<8x128xf32>, vector<128x256xf32>, vector<8x256xf32> -> vector<8x256xf32>
    %c8_i32 = arith.constant 8 : i32
    %14 = arith.muli %arg0, %c8_i32 : i32
    %15 = tpu.assume_multiple %14, 8 : i32
    %16 = arith.index_cast %15 : i32 to index
    %c0_8 = arith.constant 0 : index
    %17 = vector.load %arg4[%16, %c0_8] : memref<16x256xf32, #tpu.memory_space<vmem>>, vector<8x256xf32>
    tpu.vector_store %arg4[%16, %c0_8], %13 {strides = array<i32>} : memref<16x256xf32, #tpu.memory_space<vmem>>, vector<8x256xf32>,
    %c1_i32 = arith.constant 1 : i32
    %18 = arith.cmpi eq, %arg0, %c1_i32 : i32
    %19 = arith.extui %18 : i1 to i32
    %c0_i32 = arith.constant 0 : i32
    %20 = arith.cmpi ne, %19, %c0_i32 : i32
    scf.if %20 {
      %c0_9 = arith.constant 0 : index
      %c0_10 = arith.constant 0 : index
      %21 = vector.load %arg4[%c0_9, %c0_10] : memref<16x256xf32, #tpu.memory_space<vmem>>, vector<16x256xf32>
      %cst_11 = arith.constant dense<0.000000e+00> : vector<256xf32>
      %22 = vector.multi_reduction <add>, %21, %cst_11 [0] : vector<16x256xf32> to vector<256xf32>
      %23 = vector.shape_cast %22 : vector<256xf32> to vector<1x256xf32>
      %cst_12 = arith.constant 6.250000e-02 : f32
      %24 = vector.broadcast %cst_12 : f32 to vector<1x256xf32>
      %25 = arith.mulf %23, %24 : vector<1x256xf32>
      %26 = vector.broadcast %25 : vector<1x256xf32> to vector<16x256xf32>
      %27 = arith.subf %21, %26 : vector<16x256xf32>
      %28 = arith.mulf %27, %27 : vector<16x256xf32>
      %cst_13 = arith.constant dense<0.000000e+00> : vector<256xf32>
      %29 = vector.multi_reduction <add>, %28, %cst_13 [0] : vector<16x256xf32> to vector<256xf32>
      %30 = vector.shape_cast %29 : vector<256xf32> to vector<1x256xf32>
      %cst_14 = arith.constant 6.250000e-02 : f32
      %31 = vector.broadcast %cst_14 : f32 to vector<1x256xf32>
      %32 = arith.mulf %30, %31 : vector<1x256xf32>
      %cst_15 = arith.constant 9.99999974E-6 : f32
      %33 = vector.broadcast %cst_15 : f32 to vector<1x256xf32>
      %34 = arith.addf %32, %33 : vector<1x256xf32>
      %35 = math.rsqrt %34 : vector<1x256xf32>
      %36 = vector.broadcast %35 : vector<1x256xf32> to vector<16x256xf32>
      %37 = arith.mulf %27, %36 : vector<16x256xf32>
      %38 = arith.mulf %37, %37 : vector<16x256xf32>
      %cst_16 = arith.constant dense<0.000000e+00> : vector<16xf32>
      %39 = vector.multi_reduction <add>, %38, %cst_16 [1] : vector<16x256xf32> to vector<16xf32>
      %40 = vector.shape_cast %39 : vector<16xf32> to vector<16x1xf32>
      %cst_17 = arith.constant 1.000000e-24 : f32
      %41 = vector.broadcast %cst_17 : f32 to vector<16x1xf32>
      %42 = arith.maximumf %40, %41 : vector<16x1xf32>
      %43 = math.rsqrt %42 : vector<16x1xf32>
      %44 = vector.broadcast %43 : vector<16x1xf32> to vector<16x256xf32>
      %45 = arith.mulf %37, %44 : vector<16x256xf32>
      %c0_18 = arith.constant 0 : index
      %c0_19 = arith.constant 0 : index
      %46 = vector.load %arg3[%c0_18, %c0_19] : memref<16x256xf32, #tpu.memory_space<vmem>>, vector<16x256xf32>
      tpu.vector_store %arg3[%c0_18, %c0_19], %45 {strides = array<i32>} : memref<16x256xf32, #tpu.memory_space<vmem>>, vector<16x256xf32>,
    } else {
    }
    return
  }
  func.func @transform_0(%arg0: i32) -> (i32, i32, i32) {
    %c0_i32 = arith.constant 0 : i32
    %c0_i32_0 = arith.constant 0 : i32
    %c0_i32_1 = arith.constant 0 : i32
    return %arg0, %c0_i32, %c0_i32_0 : i32, i32, i32
  }
  func.func @transform_1(%arg0: i32) -> (i32, i32) {
    %c0_i32 = arith.constant 0 : i32
    %c0_i32_0 = arith.constant 0 : i32
    %c0_i32_1 = arith.constant 0 : i32
    return %c0_i32, %c0_i32_0 : i32, i32
  }
  func.func @transform_2(%arg0: i32) -> (i32, i32) {
    %c0_i32 = arith.constant 0 : i32
    %c0_i32_0 = arith.constant 0 : i32
    %c0_i32_1 = arith.constant 0 : i32
    return %c0_i32, %c0_i32_0 : i32, i32
  }
}

</mosaic_0001>

<llo_original>
// kernel: tpu_custom_call.1
$region0: #{tpu_custom_call.1}
  #allocation0 [shape = 'u32[]', space=smem, size = 0x4, offset = 0x4, fixed_abs, tag = 'smem constant byte address 0x4 - core index']
  #allocation1 [shape = 'u32[72,128]{1,0:T(1,128)}', space=vmem, size = 0x9000, scoped, tag = 'internal scratch']
  #allocation2 [shape = 'f32[16,256]{1,0:T(8,128)}', space=vmem, size = 0x4000, scoped, tag = 'scratch operand']
  %s0 = inlined_call_operand.hbm [shape: f32[16,64,128], index: 0, kind: input, shape index: {}]
  %s1 = inlined_call_operand.hbm [shape: f32[128,256], index: 1, kind: input, shape index: {}]
  %s2 = inlined_call_operand.hbm [shape: f32[16,256], index: 2, kind: output, shape index: {}]
  %s3 = sld [smem:[#allocation0]]
  $region53: #{tpu_custom_call.1} parent=0
    _
  %s5 = ssub.s32 1, %s3
  %s6 = scalar_select 0, %s5, %s3
  $region1: #{tpu_custom_call.1} parent=0
    #allocation3 [shape = 'u8[524288]{0}', space=vmem, size = 0x80000, scoped, tag = 'input window, operand 0']
    #allocation4 [shape = 's32[2]{0}', space=sflag, size = 0x8, scoped, tag = 'scoped memory for tpu_custom_call.1']
    #allocation5 [shape = 's32[2]{0}', space=sflag, size = 0x8, scoped, tag = 'scoped memory for tpu_custom_call.1']
    #allocation6 [shape = 'u8[131072]{0}', space=vmem, size = 0x20000, scoped, tag = 'input window, operand 1, single buffered']
    #allocation7 [shape = 's32[1]{0}', space=sflag, size = 0x4, scoped, tag = 'scoped memory for tpu_custom_call.1']
    #allocation8 [shape = 'u8[16384]{0}', space=vmem, size = 0x4000, scoped, tag = 'output window, operand 0, single buffered']
    %7 = vsyncpa [#allocation4], 0
    %s8 = scalar_lea.sflag [#allocation4], 1
    %9 = vsyncpa %s8, 0
    %10 = vsyncpa [#allocation7], 0
    %11 = vsyncpa [#allocation5], 0
    loop: start=0, step=1, limit=4
    $region2: #{tpu_custom_call.1} parent=1 // loop_pre_header
      _
    $region3: #{tpu_custom_call.1} parent=1 // loop_header
      %s13 = sphi 0, %s17
      %p14 = scmp.ge.s32.totalorder %s13, 4
      %s23 = sphi 0, %s25
      %s26 = sphi 0, %s23
      %s27 = sphi 0, %s26
      %s43 = sphi 0, %s27
      %s47 = sphi 0, %s47
      %s49 = sphi 0, %s47
      %s50 = sphi 0, %s49
      %s64 = sphi 0, %s50
      %s68 = sphi 0, %s68
      %s70 = sphi 0, %s68
      %s71 = sphi 0, %s70
      %s85 = sphi 0, %s71
    $region4: #{tpu_custom_call.1} parent=1 // loop_header_branch
      %16 = sbr.rel (%p14) target = $region8
    $region5: #{tpu_custom_call.1} parent=1 // loop_body
      %s18 = ssub.s32 %s13, 1
      %s19 = ssub.s32 %s13, 2
      %s20 = sadd.s32 %s13, 1
      %s21 = ssub.s32 %s13, %s20
      %p22 = scmp.eq.s32.totalorder %s21, 0
      %s24 = sadd.s32 %s23, 1
      %s25 = scalar_select %p22, %s23, %s24
      %p28 = pneg %p22
      %p29 = scmp.eq.s32.totalorder %s13, 1
      %p30 = por %p28, %p29
      %p31 = scmp.ne.s32.totalorder %s23, %s26
      %p32 = scmp.eq.s32.totalorder %s13, 0
      %p33 = por %p31, %p32
      %p34 = scmp.ne.s32.totalorder %s23, %s26
      %p35 = scmp.eq.s32.totalorder %s18, 1
      %p36 = por %p34, %p35
      %p37 = scmp.ne.s32.totalorder %s26, %s27
      %p38 = scmp.eq.s32.totalorder %s18, 0
      %p39 = por %p37, %p38
      %p40 = scmp.ne.s32.totalorder %s26, %s27
      %p41 = scmp.eq.s32.totalorder %s19, 1
      %p42 = por %p40, %p41
      %p44 = scmp.ne.s32.totalorder %s27, %s43
      %p45 = scmp.eq.s32.totalorder %s19, 0
      %p46 = por %p44, %p45
      %s48 = sadd.s32 %s47, 1
      %p51 = scmp.eq.s32.totalorder %s13, 1
      %p52 = scmp.ne.s32.totalorder %s47, %s49
      %p53 = scmp.eq.s32.totalorder %s13, 0
      %p54 = por %p52, %p53
      %p55 = scmp.ne.s32.totalorder %s47, %s49
      %p56 = scmp.eq.s32.totalorder %s18, 1
      %p57 = por %p55, %p56
      %p58 = scmp.ne.s32.totalorder %s49, %s50
      %p59 = scmp.eq.s32.totalorder %s18, 0
      %p60 = por %p58, %p59
      %p61 = scmp.ne.s32.totalorder %s49, %s50
      %p62 = scmp.eq.s32.totalorder %s19, 1
      %p63 = por %p61, %p62
      %p65 = scmp.ne.s32.totalorder %s50, %s64
      %p66 = scmp.eq.s32.totalorder %s19, 0
      %p67 = por %p65, %p66
      %s69 = sadd.s32 %s68, 1
      %p72 = scmp.eq.s32.totalorder %s13, 1
      %p73 = scmp.ne.s32.totalorder %s68, %s70
      %p74 = scmp.eq.s32.totalorder %s13, 0
      %p75 = por %p73, %p74
      %p76 = scmp.ne.s32.totalorder %s68, %s70
      %p77 = scmp.eq.s32.totalorder %s18, 1
      %p78 = por %p76, %p77
      %p79 = scmp.ne.s32.totalorder %s70, %s71
      %p80 = scmp.eq.s32.totalorder %s18, 0
      %p81 = por %p79, %p80
      %p82 = scmp.ne.s32.totalorder %s70, %s71
      %p83 = scmp.eq.s32.totalorder %s19, 1
      %p84 = por %p82, %p83
      %p86 = scmp.ne.s32.totalorder %s71, %s85
      %p87 = scmp.eq.s32.totalorder %s19, 0
      %p88 = por %p86, %p87
      %p89 = scmp.le.s32.totalorder 1, %s13
      %p90 = scmp.lt.s32.totalorder %s13, 3
      %p91 = pnand %p89, %p90
      %p92 = pneg %p91
      // Predicated region
      $region9: #{tpu_custom_call.1} parent=5 // pred_check
        _
      $region10: #{tpu_custom_call.1} parent=5 // pred_check_branch
        %94 = sbr.rel (%p91) target = $region12
      $region11: #{tpu_custom_call.1} parent=5 // pred_region
        %s95 = ssub.s32 %s13, 1
        // Predicated region
        $region13: #{tpu_custom_call.1} parent=11 // pred_check
          %p96 = pneg %p60
        $region14: #{tpu_custom_call.1} parent=11 // pred_check_branch
          %98 = sbr.rel (%p96) target = $region16
        $region15: #{tpu_custom_call.1} parent=11 // pred_region
          %100 = vsyncadd [#allocation7], 0
          %s101 = sshll.u32 %s1, 4
          %s102 = int_to_ptr.hbm [resolvable:$true] %s101
          %s103 = sshll.u32 [#allocation6], 4
          %s104 = int_to_ptr.vmem [resolvable:$true] %s103
          %109 = dma.hbm_to_vmem [thread:$0]  %s102, 4096, %s104, [#allocation7], 256, 256, 16
        $region16: #{tpu_custom_call.1} parent=11 // pred_fallthru
          _
      $region12: #{tpu_custom_call.1} parent=5 // pred_fallthru
        _
      %p110 = scmp.lt.s32.totalorder %s13, 2
      // Predicated region
      $region17: #{tpu_custom_call.1} parent=5 // pred_check
        %p111 = pneg %p110
      $region18: #{tpu_custom_call.1} parent=5 // pred_check_branch
        %113 = sbr.rel (%p111) target = $region20
      $region19: #{tpu_custom_call.1} parent=5 // pred_region
        // Predicated region
        $region21: #{tpu_custom_call.1} parent=19 // pred_check
          %p114 = pneg %p33
        $region22: #{tpu_custom_call.1} parent=19 // pred_check_branch
          %116 = sbr.rel (%p114) target = $region24
        $region23: #{tpu_custom_call.1} parent=19 // pred_region
          %s117 = sand.u32 %s23, 1
          %s118 = scalar_lea.sflag [#allocation4], %s117
          %s119 = sand.u32 %s23, 1
          %s120 = smul.addr %s119, 512
          %s121 = scalar_lea.vmem [#allocation3], %s120
          %s122 = smul.u32 8, %s13
          %124 = vsyncadd %s118, 0
          %s125 = smul.addr %s122, 8
          %s126 = smul.addr %s125, 8
          %s127 = scalar_lea.hbm %s0, %s126
          %s128 = sshll.u32 %s127, 4
          %s129 = int_to_ptr.hbm [resolvable:$true] %s128
          %s130 = sshll.u32 %s121, 4
          %s131 = int_to_ptr.vmem [resolvable:$true] %s130
          %136 = dma.hbm_to_vmem [thread:$0]  %s129, 8192, %s131, %s118, 128, 128, 8
        $region24: #{tpu_custom_call.1} parent=19 // pred_fallthru
          _
      $region20: #{tpu_custom_call.1} parent=5 // pred_fallthru
        _
      %p137 = scmp.le.s32.totalorder 1, %s13
      %p138 = scmp.lt.s32.totalorder %s13, 3
      %p139 = pnand %p137, %p138
      %p140 = pneg %p139
      // Predicated region
      $region25: #{tpu_custom_call.1} parent=5 // pred_check
        _
      $region26: #{tpu_custom_call.1} parent=5 // pred_check_branch
        %142 = sbr.rel (%p139) target = $region28
      $region27: #{tpu_custom_call.1} parent=5 // pred_region
        %s143 = ssub.s32 %s13, 1
        %s144 = sand.u32 %s26, 1
        %s145 = scalar_lea.sflag [#allocation4], %s144
        %s146 = sand.u32 %s26, 1
        %s147 = smul.addr %s146, 512
        %s148 = scalar_lea.vmem [#allocation3], %s147
        // Predicated region
        $region29: #{tpu_custom_call.1} parent=27 // pred_check
          %p149 = pneg %p39
        $region30: #{tpu_custom_call.1} parent=27 // pred_check_branch
          %151 = sbr.rel (%p149) target = $region32
        $region31: #{tpu_custom_call.1} parent=27 // pred_region
          %153 = dma.done %s145, 8192
        $region32: #{tpu_custom_call.1} parent=27 // pred_fallthru
          _
        // Predicated region
        $region33: #{tpu_custom_call.1} parent=27 // pred_check
          %p154 = pneg %p60
        $region34: #{tpu_custom_call.1} parent=27 // pred_check_branch
          %156 = sbr.rel (%p154) target = $region36
        $region35: #{tpu_custom_call.1} parent=27 // pred_region
          %158 = dma.done [#allocation7], 4096
        $region36: #{tpu_custom_call.1} parent=27 // pred_fallthru
          _
        %s159 = sand.u32 %s26, 1
        %s160 = scalar_lea.sflag [#allocation4], %s159
        %s161 = sand.u32 %s26, 1
        %s162 = smul.addr %s161, 512
        %s163 = scalar_lea.vmem [#allocation3], %s162
        %p164 = pneg %p39
        %p165 = pneg %p36
        %p166 = pneg %p60
        %p167 = pneg %p57
        %p168 = pneg %p81
        %p169 = pneg %p78
        %s170 = smul.u32 8, %s18
        %v171 = vld [vmem:[%s148] sm:$0xff]
        %v172 = vld [vmem:[%s148 + $0x8] sm:$0xff]
        %v173 = vld [vmem:[%s148 + $0x10] sm:$0xff]
        %v174 = vld [vmem:[%s148 + $0x18] sm:$0xff]
        %v175 = vld [vmem:[%s148 + $0x20] sm:$0xff]
        %v176 = vld [vmem:[%s148 + $0x28] sm:$0xff]
        %v177 = vld [vmem:[%s148 + $0x30] sm:$0xff]
        %v178 = vld [vmem:[%s148 + $0x38] sm:$0xff]
        %v179 = vld [vmem:[%s148 + $0x40] sm:$0xff]
        %v180 = vld [vmem:[%s148 + $0x48] sm:$0xff]
        %v181 = vld [vmem:[%s148 + $0x50] sm:$0xff]
        %v182 = vld [vmem:[%s148 + $0x58] sm:$0xff]
        %v183 = vld [vmem:[%s148 + $0x60] sm:$0xff]
        %v184 = vld [vmem:[%s148 + $0x68] sm:$0xff]
        %v185 = vld [vmem:[%s148 + $0x70] sm:$0xff]
        %v186 = vld [vmem:[%s148 + $0x78] sm:$0xff]
        %v187 = vld [vmem:[%s148 + $0x80] sm:$0xff]
        %v188 = vld [vmem:[%s148 + $0x88] sm:$0xff]
        %v189 = vld [vmem:[%s148 + $0x90] sm:$0xff]
        %v190 = vld [vmem:[%s148 + $0x98] sm:$0xff]
        %v191 = vld [vmem:[%s148 + $0xa0] sm:$0xff]
        %v192 = vld [vmem:[%s148 + $0xa8] sm:$0xff]
        %v193 = vld [vmem:[%s148 + $0xb0] sm:$0xff]
        %v194 = vld [vmem:[%s148 + $0xb8] sm:$0xff]
        %v195 = vld [vmem:[%s148 + $0xc0] sm:$0xff]
        %v196 = vld [vmem:[%s148 + $0xc8] sm:$0xff]
        %v197 = vld [vmem:[%s148 + $0xd0] sm:$0xff]
        %v198 = vld [vmem:[%s148 + $0xd8] sm:$0xff]
        %v199 = vld [vmem:[%s148 + $0xe0] sm:$0xff]
        %v200 = vld [vmem:[%s148 + $0xe8] sm:$0xff]
        %v201 = vld [vmem:[%s148 + $0xf0] sm:$0xff]
        %v202 = vld [vmem:[%s148 + $0xf8] sm:$0xff]
        %v203 = vld [vmem:[%s148 + $0x100] sm:$0xff]
        %v204 = vld [vmem:[%s148 + $0x108] sm:$0xff]
        %v205 = vld [vmem:[%s148 + $0x110] sm:$0xff]
        %v206 = vld [vmem:[%s148 + $0x118] sm:$0xff]
        %v207 = vld [vmem:[%s148 + $0x120] sm:$0xff]
        %v208 = vld [vmem:[%s148 + $0x128] sm:$0xff]
        %v209 = vld [vmem:[%s148 + $0x130] sm:$0xff]
        %v210 = vld [vmem:[%s148 + $0x138] sm:$0xff]
        %v211 = vld [vmem:[%s148 + $0x140] sm:$0xff]
        %v212 = vld [vmem:[%s148 + $0x148] sm:$0xff]
        %v213 = vld [vmem:[%s148 + $0x150] sm:$0xff]
        %v214 = vld [vmem:[%s148 + $0x158] sm:$0xff]
        %v215 = vld [vmem:[%s148 + $0x160] sm:$0xff]
        %v216 = vld [vmem:[%s148 + $0x168] sm:$0xff]
        %v217 = vld [vmem:[%s148 + $0x170] sm:$0xff]
        %v218 = vld [vmem:[%s148 + $0x178] sm:$0xff]
        %v219 = vld [vmem:[%s148 + $0x180] sm:$0xff]
        %v220 = vld [vmem:[%s148 + $0x188] sm:$0xff]
        %v221 = vld [vmem:[%s148 + $0x190] sm:$0xff]
        %v222 = vld [vmem:[%s148 + $0x198] sm:$0xff]
        %v223 = vld [vmem:[%s148 + $0x1a0] sm:$0xff]
        %v224 = vld [vmem:[%s148 + $0x1a8] sm:$0xff]
        %v225 = vld [vmem:[%s148 + $0x1b0] sm:$0xff]
        %v226 = vld [vmem:[%s148 + $0x1b8] sm:$0xff]
        %v227 = vld [vmem:[%s148 + $0x1c0] sm:$0xff]
        %v228 = vld [vmem:[%s148 + $0x1c8] sm:$0xff]
        %v229 = vld [vmem:[%s148 + $0x1d0] sm:$0xff]
        %v230 = vld [vmem:[%s148 + $0x1d8] sm:$0xff]
        %v231 = vld [vmem:[%s148 + $0x1e0] sm:$0xff]
        %v232 = vld [vmem:[%s148 + $0x1e8] sm:$0xff]
        %v233 = vld [vmem:[%s148 + $0x1f0] sm:$0xff]
        %v234 = vld [vmem:[%s148 + $0x1f8] sm:$0xff]
        %v235 = vmax.f32 %v171, 1e-06
        %v236 = vmax.f32 %v172, 1e-06
        %v237 = vmax.f32 %v173, 1e-06
        %v238 = vmax.f32 %v174, 1e-06
        %v239 = vmax.f32 %v175, 1e-06
        %v240 = vmax.f32 %v176, 1e-06
        %v241 = vmax.f32 %v177, 1e-06
        %v242 = vmax.f32 %v178, 1e-06
        %v243 = vmax.f32 %v179, 1e-06
        %v244 = vmax.f32 %v180, 1e-06
        %v245 = vmax.f32 %v181, 1e-06
        %v246 = vmax.f32 %v182, 1e-06
        %v247 = vmax.f32 %v183, 1e-06
        %v248 = vmax.f32 %v184, 1e-06
        %v249 = vmax.f32 %v185, 1e-06
        %v250 = vmax.f32 %v186, 1e-06
        %v251 = vmax.f32 %v187, 1e-06
        %v252 = vmax.f32 %v188, 1e-06
        %v253 = vmax.f32 %v189, 1e-06
        %v254 = vmax.f32 %v190, 1e-06
        %v255 = vmax.f32 %v191, 1e-06
        %v256 = vmax.f32 %v192, 1e-06
        %v257 = vmax.f32 %v193, 1e-06
        %v258 = vmax.f32 %v194, 1e-06
        %v259 = vmax.f32 %v195, 1e-06
        %v260 = vmax.f32 %v196, 1e-06
        %v261 = vmax.f32 %v197, 1e-06
        %v262 = vmax.f32 %v198, 1e-06
        %v263 = vmax.f32 %v199, 1e-06
        %v264 = vmax.f32 %v200, 1e-06
        %v265 = vmax.f32 %v201, 1e-06
        %v266 = vmax.f32 %v202, 1e-06
        %v267 = vmax.f32 %v203, 1e-06
        %v268 = vmax.f32 %v204, 1e-06
        %v269 = vmax.f32 %v205, 1e-06
        %v270 = vmax.f32 %v206, 1e-06
        %v271 = vmax.f32 %v207, 1e-06
        %v272 = vmax.f32 %v208, 1e-06
        %v273 = vmax.f32 %v209, 1e-06
        %v274 = vmax.f32 %v210, 1e-06
        %v275 = vmax.f32 %v211, 1e-06
        %v276 = vmax.f32 %v212, 1e-06
        %v277 = vmax.f32 %v213, 1e-06
        %v278 = vmax.f32 %v214, 1e-06
        %v279 = vmax.f32 %v215, 1e-06
        %v280 = vmax.f32 %v216, 1e-06
        %v281 = vmax.f32 %v217, 1e-06
        %v282 = vmax.f32 %v218, 1e-06
        %v283 = vmax.f32 %v219, 1e-06
        %v284 = vmax.f32 %v220, 1e-06
        %v285 = vmax.f32 %v221, 1e-06
        %v286 = vmax.f32 %v222, 1e-06
        %v287 = vmax.f32 %v223, 1e-06
        %v288 = vmax.f32 %v224, 1e-06
        %v289 = vmax.f32 %v225, 1e-06
        %v290 = vmax.f32 %v226, 1e-06
        %v291 = vmax.f32 %v227, 1e-06
        %v292 = vmax.f32 %v228, 1e-06
        %v293 = vmax.f32 %v229, 1e-06
        %v294 = vmax.f32 %v230, 1e-06
        %v295 = vmax.f32 %v231, 1e-06
        %v296 = vmax.f32 %v232, 1e-06
        %v297 = vmax.f32 %v233, 1e-06
        %v298 = vmax.f32 %v234, 1e-06
        %v299 = vmul.f32 %v235, %v235
        %v300 = vmul.f32 %v236, %v236
        %v301 = vmul.f32 %v237, %v237
        %v302 = vmul.f32 %v238, %v238
        %v303 = vmul.f32 %v239, %v239
        %v304 = vmul.f32 %v240, %v240
        %v305 = vmul.f32 %v241, %v241
        %v306 = vmul.f32 %v242, %v242
        %v307 = vmul.f32 %v243, %v243
        %v308 = vmul.f32 %v244, %v244
        %v309 = vmul.f32 %v245, %v245
        %v310 = vmul.f32 %v246, %v246
        %v311 = vmul.f32 %v247, %v247
        %v312 = vmul.f32 %v248, %v248
        %v313 = vmul.f32 %v249, %v249
        %v314 = vmul.f32 %v250, %v250
        %v315 = vmul.f32 %v251, %v251
        %v316 = vmul.f32 %v252, %v252
        %v317 = vmul.f32 %v253, %v253
        %v318 = vmul.f32 %v254, %v254
        %v319 = vmul.f32 %v255, %v255
        %v320 = vmul.f32 %v256, %v256
        %v321 = vmul.f32 %v257, %v257
        %v322 = vmul.f32 %v258, %v258
        %v323 = vmul.f32 %v259, %v259
        %v324 = vmul.f32 %v260, %v260
        %v325 = vmul.f32 %v261, %v261
        %v326 = vmul.f32 %v262, %v262
        %v327 = vmul.f32 %v263, %v263
        %v328 = vmul.f32 %v264, %v264
        %v329 = vmul.f32 %v265, %v265
        %v330 = vmul.f32 %v266, %v266
        %v331 = vmul.f32 %v267, %v267
        %v332 = vmul.f32 %v268, %v268
        %v333 = vmul.f32 %v269, %v269
        %v334 = vmul.f32 %v270, %v270
        %v335 = vmul.f32 %v271, %v271
        %v336 = vmul.f32 %v272, %v272
        %v337 = vmul.f32 %v273, %v273
        %v338 = vmul.f32 %v274, %v274
        %v339 = vmul.f32 %v275, %v275
        %v340 = vmul.f32 %v276, %v276
        %v341 = vmul.f32 %v277, %v277
        %v342 = vmul.f32 %v278, %v278
        %v343 = vmul.f32 %v279, %v279
        %v344 = vmul.f32 %v280, %v280
        %v345 = vmul.f32 %v281, %v281
        %v346 = vmul.f32 %v282, %v282
        %v347 = vmul.f32 %v283, %v283
        %v348 = vmul.f32 %v284, %v284
        %v349 = vmul.f32 %v285, %v285
        %v350 = vmul.f32 %v286, %v286
        %v351 = vmul.f32 %v287, %v287
        %v352 = vmul.f32 %v288, %v288
        %v353 = vmul.f32 %v289, %v289
        %v354 = vmul.f32 %v290, %v290
        %v355 = vmul.f32 %v291, %v291
        %v356 = vmul.f32 %v292, %v292
        %v357 = vmul.f32 %v293, %v293
        %v358 = vmul.f32 %v294, %v294
        %v359 = vmul.f32 %v295, %v295
        %v360 = vmul.f32 %v296, %v296
        %v361 = vmul.f32 %v297, %v297
        %v362 = vmul.f32 %v298, %v298
        %v363 = vmul.f32 %v299, %v235
        %v364 = vmul.f32 %v300, %v236
        %v365 = vmul.f32 %v301, %v237
        %v366 = vmul.f32 %v302, %v238
        %v367 = vmul.f32 %v303, %v239
        %v368 = vmul.f32 %v304, %v240
        %v369 = vmul.f32 %v305, %v241
        %v370 = vmul.f32 %v306, %v242
        %v371 = vmul.f32 %v307, %v243
        %v372 = vmul.f32 %v308, %v244
        %v373 = vmul.f32 %v309, %v245
        %v374 = vmul.f32 %v310, %v246
        %v375 = vmul.f32 %v311, %v247
        %v376 = vmul.f32 %v312, %v248
        %v377 = vmul.f32 %v313, %v249
        %v378 = vmul.f32 %v314, %v250
        %v379 = vmul.f32 %v315, %v251
        %v380 = vmul.f32 %v316, %v252
        %v381 = vmul.f32 %v317, %v253
        %v382 = vmul.f32 %v318, %v254
        %v383 = vmul.f32 %v319, %v255
        %v384 = vmul.f32 %v320, %v256
        %v385 = vmul.f32 %v321, %v257
        %v386 = vmul.f32 %v322, %v258
        %v387 = vmul.f32 %v323, %v259
        %v388 = vmul.f32 %v324, %v260
        %v389 = vmul.f32 %v325, %v261
        %v390 = vmul.f32 %v326, %v262
        %v391 = vmul.f32 %v327, %v263
        %v392 = vmul.f32 %v328, %v264
        %v393 = vmul.f32 %v329, %v265
        %v394 = vmul.f32 %v330, %v266
        %v395 = vmul.f32 %v331, %v267
        %v396 = vmul.f32 %v332, %v268
        %v397 = vmul.f32 %v333, %v269
        %v398 = vmul.f32 %v334, %v270
        %v399 = vmul.f32 %v335, %v271
        %v400 = vmul.f32 %v336, %v272
        %v401 = vmul.f32 %v337, %v273
        %v402 = vmul.f32 %v338, %v274
        %v403 = vmul.f32 %v339, %v275
        %v404 = vmul.f32 %v340, %v276
        %v405 = vmul.f32 %v341, %v277
        %v406 = vmul.f32 %v342, %v278
        %v407 = vmul.f32 %v343, %v279
        %v408 = vmul.f32 %v344, %v280
        %v409 = vmul.f32 %v345, %v281
        %v410 = vmul.f32 %v346, %v282
        %v411 = vmul.f32 %v347, %v283
        %v412 = vmul.f32 %v348, %v284
        %v413 = vmul.f32 %v349, %v285
        %v414 = vmul.f32 %v350, %v286
        %v415 = vmul.f32 %v351, %v287
        %v416 = vmul.f32 %v352, %v288
        %v417 = vmul.f32 %v353, %v289
        %v418 = vmul.f32 %v354, %v290
        %v419 = vmul.f32 %v355, %v291
        %v420 = vmul.f32 %v356, %v292
        %v421 = vmul.f32 %v357, %v293
        %v422 = vmul.f32 %v358, %v294
        %v423 = vmul.f32 %v359, %v295
        %v424 = vmul.f32 %v360, %v296
        %v425 = vmul.f32 %v361, %v297
        %v426 = vmul.f32 %v362, %v298
        %v427 = vadd.f32 %v363, %v364
        %v428 = vadd.f32 %v427, %v365
        %v429 = vadd.f32 %v428, %v366
        %v430 = vadd.f32 %v429, %v367
        %v431 = vadd.f32 %v430, %v368
        %v432 = vadd.f32 %v431, %v369
        %v433 = vadd.f32 %v432, %v370
        %v434 = vrot.slane %v433, 4
        %v435 = vadd.f32 %v433, %v434
        %v436 = vrot.slane %v435, 2
        %v437 = vadd.f32 %v435, %v436
        %v438 = vrot.slane %v437, 1
        %v439 = vadd.f32 %v437, %v438
        %v440 = vadd.f32 %v371, %v372
        %v441 = vadd.f32 %v440, %v373
        %v442 = vadd.f32 %v441, %v374
        %v443 = vadd.f32 %v442, %v375
        %v444 = vadd.f32 %v443, %v376
        %v445 = vadd.f32 %v444, %v377
        %v446 = vadd.f32 %v445, %v378
        %v447 = vrot.slane %v446, 4
        %v448 = vadd.f32 %v446, %v447
        %v449 = vrot.slane %v448, 2
        %v450 = vadd.f32 %v448, %v449
        %v451 = vrot.slane %v450, 1
        %v452 = vadd.f32 %v450, %v451
        %v453 = vadd.f32 %v379, %v380
        %v454 = vadd.f32 %v453, %v381
        %v455 = vadd.f32 %v454, %v382
        %v456 = vadd.f32 %v455, %v383
        %v457 = vadd.f32 %v456, %v384
        %v458 = vadd.f32 %v457, %v385
        %v459 = vadd.f32 %v458, %v386
        %v460 = vrot.slane %v459, 4
        %v461 = vadd.f32 %v459, %v460
        %v462 = vrot.slane %v461, 2
        %v463 = vadd.f32 %v461, %v462
        %v464 = vrot.slane %v463, 1
        %v465 = vadd.f32 %v463, %v464
        %v466 = vadd.f32 %v387, %v388
        %v467 = vadd.f32 %v466, %v389
        %v468 = vadd.f32 %v467, %v390
        %v469 = vadd.f32 %v468, %v391
        %v470 = vadd.f32 %v469, %v392
        %v471 = vadd.f32 %v470, %v393
        %v472 = vadd.f32 %v471, %v394
        %v473 = vrot.slane %v472, 4
        %v474 = vadd.f32 %v472, %v473
        %v475 = vrot.slane %v474, 2
        %v476 = vadd.f32 %v474, %v475
        %v477 = vrot.slane %v476, 1
        %v478 = vadd.f32 %v476, %v477
        %v479 = vadd.f32 %v395, %v396
        %v480 = vadd.f32 %v479, %v397
        %v481 = vadd.f32 %v480, %v398
        %v482 = vadd.f32 %v481, %v399
        %v483 = vadd.f32 %v482, %v400
        %v484 = vadd.f32 %v483, %v401
        %v485 = vadd.f32 %v484, %v402
        %v486 = vrot.slane %v485, 4
        %v487 = vadd.f32 %v485, %v486
        %v488 = vrot.slane %v487, 2
        %v489 = vadd.f32 %v487, %v488
        %v490 = vrot.slane %v489, 1
        %v491 = vadd.f32 %v489, %v490
        %v492 = vadd.f32 %v403, %v404
        %v493 = vadd.f32 %v492, %v405
        %v494 = vadd.f32 %v493, %v406
        %v495 = vadd.f32 %v494, %v407
        %v496 = vadd.f32 %v495, %v408
        %v497 = vadd.f32 %v496, %v409
        %v498 = vadd.f32 %v497, %v410
        %v499 = vrot.slane %v498, 4
        %v500 = vadd.f32 %v498, %v499
        %v501 = vrot.slane %v500, 2
        %v502 = vadd.f32 %v500, %v501
        %v503 = vrot.slane %v502, 1
        %v504 = vadd.f32 %v502, %v503
        %v505 = vadd.f32 %v411, %v412
        %v506 = vadd.f32 %v505, %v413
        %v507 = vadd.f32 %v506, %v414
        %v508 = vadd.f32 %v507, %v415
        %v509 = vadd.f32 %v508, %v416
        %v510 = vadd.f32 %v509, %v417
        %v511 = vadd.f32 %v510, %v418
        %v512 = vrot.slane %v511, 4
        %v513 = vadd.f32 %v511, %v512
        %v514 = vrot.slane %v513, 2
        %v515 = vadd.f32 %v513, %v514
        %v516 = vrot.slane %v515, 1
        %v517 = vadd.f32 %v515, %v516
        %v518 = vadd.f32 %v419, %v420
        %v519 = vadd.f32 %v518, %v421
        %v520 = vadd.f32 %v519, %v422
        %v521 = vadd.f32 %v520, %v423
        %v522 = vadd.f32 %v521, %v424
        %v523 = vadd.f32 %v522, %v425
        %v524 = vadd.f32 %v523, %v426
        %v525 = vrot.slane %v524, 4
        %v526 = vadd.f32 %v524, %v525
        %v527 = vrot.slane %v526, 2
        %v528 = vadd.f32 %v526, %v527
        %v529 = vrot.slane %v528, 1
        %v530 = vadd.f32 %v528, %v529
        %v531 = vrcp.pop 64.0
        %v532 = vmul.f32 64.0, %v531
        %v533 = vsub.f32 1.0, %v532
        %v534 = vmul.f32 %v531, %v533
        %v535 = vadd.f32 %v531, %v534
        %vm536 = vweird.f32 %v531
        %v537 = vsel %vm536, %v531, %v535
        %v538 = vmul.f32 %v439, %v537
        %v539 = vmul.f32 %v452, %v537
        %v540 = vmul.f32 %v465, %v537
        %v541 = vmul.f32 %v478, %v537
        %v542 = vmul.f32 %v491, %v537
        %v543 = vmul.f32 %v504, %v537
        %v544 = vmul.f32 %v517, %v537
        %v545 = vmul.f32 %v530, %v537
        %v546 = vlog2.pop %v538
        %v547 = vmul.f32 %v546, 0.6931472
        %v548 = vlog2.pop %v539
        %v549 = vmul.f32 %v548, 0.6931472
        %v550 = vlog2.pop %v540
        %v551 = vmul.f32 %v550, 0.6931472
        %v552 = vlog2.pop %v541
        %v553 = vmul.f32 %v552, 0.6931472
        %v554 = vlog2.pop %v542
        %v555 = vmul.f32 %v554, 0.6931472
        %v556 = vlog2.pop %v543
        %v557 = vmul.f32 %v556, 0.6931472
        %v558 = vlog2.pop %v544
        %v559 = vmul.f32 %v558, 0.6931472
        %v560 = vlog2.pop %v545
        %v561 = vmul.f32 %v560, 0.6931472
        %v562 = vrcp.pop 3.0
        %v563 = vmul.f32 3.0, %v562
        %v564 = vsub.f32 1.0, %v563
        %v565 = vmul.f32 %v562, %v564
        %v566 = vadd.f32 %v562, %v565
        %vm567 = vweird.f32 %v562
        %v568 = vsel %vm567, %v562, %v566
        %v569 = vmul.f32 %v547, %v568
        %v570 = vmul.f32 %v549, %v568
        %v571 = vmul.f32 %v551, %v568
        %v572 = vmul.f32 %v553, %v568
        %v573 = vmul.f32 %v555, %v568
        %v574 = vmul.f32 %v557, %v568
        %v575 = vmul.f32 %v559, %v568
        %v576 = vmul.f32 %v561, %v568
        %v577 = vmul.f32 %v569, 1.442695
        %v578 = vpow.pop %v577
        %v579 = vmul.f32 %v570, 1.442695
        %v580 = vpow.pop %v579
        %v581 = vmul.f32 %v571, 1.442695
        %v582 = vpow.pop %v581
        %v583 = vmul.f32 %v572, 1.442695
        %v584 = vpow.pop %v583
        %v585 = vmul.f32 %v573, 1.442695
        %v586 = vpow.pop %v585
        %v587 = vmul.f32 %v574, 1.442695
        %v588 = vpow.pop %v587
        %v589 = vmul.f32 %v575, 1.442695
        %v590 = vpow.pop %v589
        %v591 = vmul.f32 %v576, 1.442695
        %v592 = vpow.pop %v591
        %v593 = vld [vmem:[#allocation6] sm:$0xff]
        %v594 = vld [vmem:[#allocation6 + $0x8] sm:$0xff]
        %v595 = vld [vmem:[#allocation6 + $0x10] sm:$0xff]
        %v596 = vld [vmem:[#allocation6 + $0x18] sm:$0xff]
        %v597 = vld [vmem:[#allocation6 + $0x20] sm:$0xff]
        %v598 = vld [vmem:[#allocation6 + $0x28] sm:$0xff]
        %v599 = vld [vmem:[#allocation6 + $0x30] sm:$0xff]
        %v600 = vld [vmem:[#allocation6 + $0x38] sm:$0xff]
        %v601 = vld [vmem:[#allocation6 + $0x40] sm:$0xff]
        %v602 = vld [vmem:[#allocation6 + $0x48] sm:$0xff]
        %v603 = vld [vmem:[#allocation6 + $0x50] sm:$0xff]
        %v604 = vld [vmem:[#allocation6 + $0x58] sm:$0xff]
        %v605 = vld [vmem:[#allocation6 + $0x60] sm:$0xff]
        %v606 = vld [vmem:[#allocation6 + $0x68] sm:$0xff]
        %v607 = vld [vmem:[#allocation6 + $0x70] sm:$0xff]
        %v608 = vld [vmem:[#allocation6 + $0x78] sm:$0xff]
        %v609 = vld [vmem:[#allocation6 + $0x80] sm:$0xff]
        %v610 = vld [vmem:[#allocation6 + $0x88] sm:$0xff]
        %v611 = vld [vmem:[#allocation6 + $0x90] sm:$0xff]
        %v612 = vld [vmem:[#allocation6 + $0x98] sm:$0xff]
        %v613 = vld [vmem:[#allocation6 + $0xa0] sm:$0xff]
        %v614 = vld [vmem:[#allocation6 + $0xa8] sm:$0xff]
        %v615 = vld [vmem:[#allocation6 + $0xb0] sm:$0xff]
        %v616 = vld [vmem:[#allocation6 + $0xb8] sm:$0xff]
        %v617 = vld [vmem:[#allocation6 + $0xc0] sm:$0xff]
        %v618 = vld [vmem:[#allocation6 + $0xc8] sm:$0xff]
        %v619 = vld [vmem:[#allocation6 + $0xd0] sm:$0xff]
        %v620 = vld [vmem:[#allocation6 + $0xd8] sm:$0xff]
        %v621 = vld [vmem:[#allocation6 + $0xe0] sm:$0xff]
        %v622 = vld [vmem:[#allocation6 + $0xe8] sm:$0xff]
        %v623 = vld [vmem:[#allocation6 + $0xf0] sm:$0xff]
        %v624 = vld [vmem:[#allocation6 + $0xf8] sm:$0xff]
        %vm633 = vcmask 1041409
        %v634 = vsel %vm633, %v580, %v578
        %vm635 = vcmask 1042434
        %v636 = vsel %vm635, %v582, %v634
        %vm637 = vcmask 1043459
        %v638 = vsel %vm637, %v584, %v636
        %vm639 = vcmask 1044484
        %v640 = vsel %vm639, %v586, %v638
        %vm641 = vcmask 1045509
        %v642 = vsel %vm641, %v588, %v640
        %vm643 = vcmask 1046534
        %v644 = vsel %vm643, %v590, %v642
        %vm645 = vcmask 1047559
        %v646 = vsel %vm645, %v592, %v644
        %648 = vmatpush.msra.mxu0 %v623
        %649 = vmatpush.msra.mxu0 %v621
        %650 = vmatpush.msra.mxu0 %v619
        %651 = vmatpush.msra.mxu0 %v617
        %652 = vmatpush.msra.mxu0 %v615
        %653 = vmatpush.msra.mxu0 %v613
        %654 = vmatpush.msra.mxu0 %v611
        %655 = vmatpush.msra.mxu0 %v609
        %656 = vmatpush.msra.mxu0 %v607
        %657 = vmatpush.msra.mxu0 %v605
        %658 = vmatpush.msra.mxu0 %v603
        %659 = vmatpush.msra.mxu0 %v601
        %660 = vmatpush.msra.mxu0 %v599
        %661 = vmatpush.msra.mxu0 %v597
        %662 = vmatpush.msra.mxu0 %v595
        %663 = vmatpush.msra.mxu0 %v593
        %664 = vmatmul.f32.gmra.mxu0 %v646
        %v665 = vpop.f32.mrf.mxu0
        %v666 = vadd.f32 0.0, %v665
        %667 = vdwg.mxu0
        %668 = vmatpush.msra.mxu0 %v624
        %669 = vmatpush.msra.mxu0 %v622
        %670 = vmatpush.msra.mxu0 %v620
        %671 = vmatpush.msra.mxu0 %v618
        %672 = vmatpush.msra.mxu0 %v616
        %673 = vmatpush.msra.mxu0 %v614
        %674 = vmatpush.msra.mxu0 %v612
        %675 = vmatpush.msra.mxu0 %v610
        %676 = vmatpush.msra.mxu0 %v608
        %677 = vmatpush.msra.mxu0 %v606
        %678 = vmatpush.msra.mxu0 %v604
        %679 = vmatpush.msra.mxu0 %v602
        %680 = vmatpush.msra.mxu0 %v600
        %681 = vmatpush.msra.mxu0 %v598
        %682 = vmatpush.msra.mxu0 %v596
        %683 = vmatpush.msra.mxu0 %v594
        %684 = vmatmul.f32.gmra.mxu0 %v646
        %v685 = vpop.f32.mrf.mxu0
        %v686 = vadd.f32 0.0, %v685
        %687 = vdwg.mxu0
        %s688 = smul.u32 %s18, 8
        %s689 = sshra.s32 %s688, 3
        %s690 = sand.u32 %s688, 7
        %s691 = smul.u32 %s689, 2
        %s692 = smul.addr %s691, 8
        %s693 = scalar_lea.vmem [#allocation2], %s692
        %694 = vst [vmem:[%s693] sm:$0xff] %v666
        %695 = vst [vmem:[%s693 + $0x8] sm:$0xff] %v686
        %p696 = scmp.eq.s32.totalorder %s18, 1
        // Predicated region
        $region37: #{tpu_custom_call.1} parent=27 // pred_check
          %p697 = pneg %p696
        $region38: #{tpu_custom_call.1} parent=27 // pred_check_branch
          %699 = sbr.rel (%p697) target = $region40
        $region39: #{tpu_custom_call.1} parent=27 // pred_region
          %v700 = vld [vmem:[#allocation2] sm:$0xff]
          %v701 = vld [vmem:[#allocation2 + $0x8] sm:$0xff]
          %v702 = vld [vmem:[#allocation2 + $0x10] sm:$0xff]
          %v703 = vld [vmem:[#allocation2 + $0x18] sm:$0xff]
          %v704 = vadd.f32 %v700, %v702
          %v705 = vrot.slane %v704, 4
          %v706 = vadd.f32 %v704, %v705
          %v707 = vrot.slane %v706, 2
          %v708 = vadd.f32 %v706, %v707
          %v709 = vrot.slane %v708, 1
          %v710 = vadd.f32 %v708, %v709
          %v711 = vadd.f32 %v701, %v703
          %v712 = vrot.slane %v711, 4
          %v713 = vadd.f32 %v711, %v712
          %v714 = vrot.slane %v713, 2
          %v715 = vadd.f32 %v713, %v714
          %v716 = vrot.slane %v715, 1
          %v717 = vadd.f32 %v715, %v716
          %v718 = vmul.f32 %v710, 0.0625
          %v719 = vmul.f32 %v717, 0.0625
          %v720 = vsub.f32 %v700, %v718
          %v721 = vsub.f32 %v701, %v719
          %v722 = vsub.f32 %v702, %v718
          %v723 = vsub.f32 %v703, %v719
          %v724 = vmul.f32 %v720, %v720
          %v725 = vmul.f32 %v721, %v721
          %v726 = vmul.f32 %v722, %v722
          %v727 = vmul.f32 %v723, %v723
          %v728 = vadd.f32 %v724, %v726
          %v729 = vrot.slane %v728, 4
          %v730 = vadd.f32 %v728, %v729
          %v731 = vrot.slane %v730, 2
          %v732 = vadd.f32 %v730, %v731
          %v733 = vrot.slane %v732, 1
          %v734 = vadd.f32 %v732, %v733
          %v735 = vadd.f32 %v725, %v727
          %v736 = vrot.slane %v735, 4
          %v737 = vadd.f32 %v735, %v736
          %v738 = vrot.slane %v737, 2
          %v739 = vadd.f32 %v737, %v738
          %v740 = vrot.slane %v739, 1
          %v741 = vadd.f32 %v739, %v740
          %v742 = vmul.f32 %v734, 0.0625
          %v743 = vmul.f32 %v741, 0.0625
          %v744 = vadd.f32 %v742, 1e-05
          %v745 = vadd.f32 %v743, 1e-05
          %v746 = vrsqrt.pop %v744
          %v747 = vmul.f32 %v746, %v744
          %v748 = vmul.f32 %v747, %v746
          %v749 = vmul.f32 0.5, %v748
          %v750 = vsub.f32 1.5, %v749
          %v751 = vmul.f32 %v746, %v750
          %vm752 = vweird.f32 %v744
          %vm753 = vweird.f32 %v746
          %vm754 = vmor %vm752, %vm753
          %v755 = vsel %vm754, %v746, %v751
          %v756 = vrsqrt.pop %v745
          %v757 = vmul.f32 %v756, %v745
          %v758 = vmul.f32 %v757, %v756
          %v759 = vmul.f32 0.5, %v758
          %v760 = vsub.f32 1.5, %v759
          %v761 = vmul.f32 %v756, %v760
          %vm762 = vweird.f32 %v745
          %vm763 = vweird.f32 %v756
          %vm764 = vmor %vm762, %vm763
          %v765 = vsel %vm764, %v756, %v761
          %v766 = vmul.f32 %v720, %v755
          %v767 = vmul.f32 %v721, %v765
          %v768 = vmul.f32 %v722, %v755
          %v769 = vmul.f32 %v723, %v765
          %v770 = vmul.f32 %v766, %v766
          %v771 = vmul.f32 %v767, %v767
          %v772 = vmul.f32 %v768, %v768
          %v773 = vmul.f32 %v769, %v769
          %v774 = vadd.f32 %v770, %v771
          %775 = vadd.xlane.f32.xlu0 %v774
          %v776 = vpop.xlane.xlu0 %775
          %v777 = vadd.f32 %v772, %v773
          %778 = vadd.xlane.f32.xlu0 %v777
          %v779 = vpop.xlane.xlu0 %778
          %v780 = vmax.f32 %v776, 1e-24
          %v781 = vmax.f32 %v779, 1e-24
          %v782 = vrsqrt.pop %v780
          %v783 = vmul.f32 %v782, %v780
          %v784 = vmul.f32 %v783, %v782
          %v785 = vmul.f32 0.5, %v784
          %v786 = vsub.f32 1.5, %v785
          %v787 = vmul.f32 %v782, %v786
          %vm788 = vweird.f32 %v780
          %vm789 = vweird.f32 %v782
          %vm790 = vmor %vm788, %vm789
          %v791 = vsel %vm790, %v782, %v787
          %v792 = vrsqrt.pop %v781
          %v793 = vmul.f32 %v792, %v781
          %v794 = vmul.f32 %v793, %v792
          %v795 = vmul.f32 0.5, %v794
          %v796 = vsub.f32 1.5, %v795
          %v797 = vmul.f32 %v792, %v796
          %vm798 = vweird.f32 %v781
          %vm799 = vweird.f32 %v792
          %vm800 = vmor %vm798, %vm799
          %v801 = vsel %vm800, %v792, %v797
          %v802 = vmul.f32 %v766, %v791
          %v803 = vmul.f32 %v767, %v791
          %v804 = vmul.f32 %v768, %v801
          %v805 = vmul.f32 %v769, %v801
          %806 = vst [vmem:[#allocation8] sm:$0xff] %v802
          %807 = vst [vmem:[#allocation8 + $0x8] sm:$0xff] %v803
          %808 = vst [vmem:[#allocation8 + $0x10] sm:$0xff] %v804
          %809 = vst [vmem:[#allocation8 + $0x18] sm:$0xff] %v805
        $region40: #{tpu_custom_call.1} parent=27 // pred_fallthru
          _
        // Predicated region
        $region41: #{tpu_custom_call.1} parent=27 // pred_check
          %p810 = pneg %p78
        $region42: #{tpu_custom_call.1} parent=27 // pred_check_branch
          %812 = sbr.rel (%p810) target = $region44
        $region43: #{tpu_custom_call.1} parent=27 // pred_region
          %814 = vsyncadd [#allocation5], 0
          %s815 = sshll.u32 [#allocation8], 4
          %s816 = int_to_ptr.vmem [resolvable:$true] %s815
          %s817 = sshll.u32 %s2, 4
          %s818 = int_to_ptr.hbm [resolvable:$true] %s817
          %823 = dma.vmem_to_hbm [thread:$0]  %s816, 512, %s818, [#allocation5], 256, 256, 16
        $region44: #{tpu_custom_call.1} parent=27 // pred_fallthru
          _
        // Predicated region
        $region45: #{tpu_custom_call.1} parent=27 // pred_check
          %p824 = pneg %p78
        $region46: #{tpu_custom_call.1} parent=27 // pred_check_branch
          %826 = sbr.rel (%p824) target = $region48
        $region47: #{tpu_custom_call.1} parent=27 // pred_region
          %828 = dma.done [#allocation5], 512
        $region48: #{tpu_custom_call.1} parent=27 // pred_fallthru
          _
      $region28: #{tpu_custom_call.1} parent=5 // pred_fallthru
        _
      %p829 = scmp.le.s32.totalorder 2, %s13
      // Predicated region
      $region49: #{tpu_custom_call.1} parent=5 // pred_check
        %p830 = pneg %p829
      $region50: #{tpu_custom_call.1} parent=5 // pred_check_branch
        %832 = sbr.rel (%p830) target = $region52
      $region51: #{tpu_custom_call.1} parent=5 // pred_region
        %s833 = ssub.s32 %s13, 2
      $region52: #{tpu_custom_call.1} parent=5 // pred_fallthru
        _
    $region6: #{tpu_custom_call.1} parent=1 // loop_footer
      %s17 = sadd.s32 1, %s13
    $region7: #{tpu_custom_call.1} parent=1 // loop_footer_branch
      %12 = sbr.rel target = $region3
    $region8: #{tpu_custom_call.1} parent=1 // loop_exit
      _
    %834 = vsyncpa [#allocation4], 1
    %s835 = scalar_lea.sflag [#allocation4], 1
    %836 = vsyncpa %s835, 1
    %837 = vsyncpa [#allocation7], 1
    %838 = vsyncpa [#allocation5], 1
    %s839 = scalar_lea.sflag [#allocation5], 1
    %840 = vsyncpa %s839, 1

</llo_original>
